<compile_context>
chip_gen: v7x
topology: tpu7x:2x2x1
jax: 0.10.0
libtpu: 0.0.40
codegen_flags: <defaults>
</compile_context>

<pallas_src>
import functools

import jax
import jax.numpy as jnp
from jax.experimental import pallas as pl
from jax.experimental.pallas import tpu as pltpu


def _round_up(x, m):
    return (x + m - 1) // m * m


# ----------------------------------------------------------------------------
# Tile caps, tuned per TPU generation (adaptively shrunk for small problems).
#   v5e: MXU is 4x128x128 -> keep 128x128 output tiles.
#   v6e/v7x: MXU is 2x256x256 -> 256-wide tiles feed the full MXU width.
# ----------------------------------------------------------------------------
try:
    _KIND = jax.devices()[0].device_kind.lower()
except Exception:  # pragma: no cover
    _KIND = ""
if "v5" in _KIND:
    _TM_MAX, _TN_MAX = 128, 128
else:
    _TM_MAX, _TN_MAX = 256, 256
_TK_CANDIDATES = (512, 256, 128)


def _pick_tk(k):
    """Pick the K tile that minimizes K padding (ties -> larger tile)."""
    best_kp, best_t = None, None
    for t in _TK_CANDIDATES:
        kp = _round_up(k, t)
        if best_kp is None or kp < best_kp or (kp == best_kp and t > best_t):
            best_kp, best_t = kp, t
    return best_t


# ----------------------------------------------------------------------------
# Fused conv-as-matmul kernel:  out = relu?( (A@B) * scale + bias [+ residual] )
#   A: (M, K) bf16 im2col patches, B: (K, N) bf16 weights, f32 accumulation.
#   scale/bias are folded BN parameters per output channel, f32.
#   Output is stored only on the last K step (pl.when-gated).
# ----------------------------------------------------------------------------
def _fused_matmul_kernel(*refs, relu, has_res):
    if has_res:
        a_ref, b_ref, s_ref, c_ref, r_ref, o_ref, acc_ref = refs
    else:
        a_ref, b_ref, s_ref, c_ref, o_ref, acc_ref = refs

    k = pl.program_id(2)

    @pl.when(k == 0)
    def _():
        acc_ref[...] = jnp.zeros_like(acc_ref)

    acc_ref[...] += jnp.dot(a_ref[...], b_ref[...],
                            preferred_element_type=jnp.float32)

    @pl.when(k == pl.num_programs(2) - 1)
    def _():
        y = acc_ref[...] * s_ref[...] + c_ref[...]
        if has_res:
            y = y + r_ref[...]
        if relu:
            y = jnp.maximum(y, 0.0)
        o_ref[...] = y.astype(o_ref.dtype)


@functools.partial(jax.jit, static_argnames=("relu",))
def _fused_matmul(a, b, scale, bias, residual, *, relu):
    """(M,K)@(K,N) with fused BN (+residual) (+ReLU) epilogue -> f32 (M,N)."""
    M, K = a.shape
    K2, N = b.shape
    assert K == K2
    tm = min(_TM_MAX, _round_up(M, 128))
    tn = min(_TN_MAX, _round_up(N, 128))
    tk = min(_pick_tk(K), _round_up(K, 128))
    Mp, Kp, Np = _round_up(M, tm), _round_up(K, tk), _round_up(N, tn)

    a_p = jnp.pad(a.astype(jnp.bfloat16), ((0, Mp - M), (0, Kp - K)))
    b_p = jnp.pad(b.astype(jnp.bfloat16), ((0, Kp - K), (0, Np - N)))
    s_p = jnp.pad(scale.astype(jnp.float32).reshape(1, N),
                  ((0, 0), (0, Np - N)))
    c_p = jnp.pad(bias.astype(jnp.float32).reshape(1, N),
                  ((0, 0), (0, Np - N)))

    in_specs = [pl.BlockSpec((tm, tk), lambda i, j, k: (i, k)),
                pl.BlockSpec((tk, tn), lambda i, j, k: (k, j)),
                pl.BlockSpec((1, tn), lambda i, j, k: (0, j)),
                pl.BlockSpec((1, tn), lambda i, j, k: (0, j))]
    args = [a_p, b_p, s_p, c_p]
    has_res = residual is not None
    if has_res:
        r_p = jnp.pad(residual.astype(jnp.float32),
                      ((0, Mp - M), (0, Np - N)))
        in_specs.append(pl.BlockSpec((tm, tn), lambda i, j, k: (i, j)))
        args.append(r_p)

    out = pl.pallas_call(
        functools.partial(_fused_matmul_kernel, relu=relu, has_res=has_res),
        out_shape=jax.ShapeDtypeStruct((Mp, Np), jnp.float32),
        grid_spec=pltpu.PrefetchScalarGridSpec(
            num_scalar_prefetch=0,
            grid=(Mp // tm, Np // tn, Kp // tk),
            in_specs=in_specs,
            out_specs=pl.BlockSpec((tm, tn), lambda i, j, k: (i, j)),
            scratch_shapes=[pltpu.VMEM((tm, tn), jnp.float32)]),
        compiler_params=pltpu.CompilerParams(
            dimension_semantics=("parallel", "parallel", "arbitrary")),
    )(*args)
    return out[:M, :N]


# ----------------------------------------------------------------------------
# Convolution = im2col (glue, bf16) + fused Pallas matmul/BN kernel.
# ----------------------------------------------------------------------------
def _im2col(x, kh, kw, stride, pad):  # x: NHWC
    N, H, W, C = x.shape
    if pad > 0:
        x = jnp.pad(x, ((0, 0), (pad, pad), (pad, pad), (0, 0)))
    Ho = (H + 2 * pad - kh) // stride + 1
    Wo = (W + 2 * pad - kw) // stride + 1
    cols = []
    for i in range(kh):
        for j in range(kw):
            s = jax.lax.slice(
                x, (0, i, j, 0),
                (N, i + (Ho - 1) * stride + 1, j + (Wo - 1) * stride + 1, C),
                (1, stride, stride, 1))
            cols.append(s)  # (N, Ho, Wo, C)
    patches = jnp.concatenate(cols, axis=-1)  # ordering (kh, kw, C)
    return patches.reshape(N * Ho * Wo, kh * kw * C), (N, Ho, Wo)


def conv2d_bn(x, w_hwio, scale, bias, *, stride, pad, relu, residual=None):
    """x: NHWC f32, w_hwio: (kh,kw,Cin,Cout). BN/residual/ReLU fused. -> NHWC f32."""
    kh, kw, Cin, Cout = w_hwio.shape
    patches, (N, Ho, Wo) = _im2col(x.astype(jnp.bfloat16), kh, kw, stride, pad)
    res2d = None if residual is None else residual.reshape(-1, Cout)
    out = _fused_matmul(patches,
                        w_hwio.reshape(kh * kw * Cin, Cout).astype(jnp.bfloat16),
                        scale, bias, res2d, relu=relu)
    return out.reshape(N, Ho, Wo, Cout)


# ----------------------------------------------------------------------------
# MaxPool 3x3 / stride 2 / pad 1: row-tiled, lane-dense max over 9 window taps.
# ----------------------------------------------------------------------------
def _max9_kernel(x_ref, o_ref):
    o_ref[...] = jnp.max(x_ref[...], axis=0)


def maxpool_3x3_s2(x):  # x: NHWC f32
    N, H, W, C = x.shape
    xpad = jnp.pad(x, ((0, 0), (1, 1), (1, 1), (0, 0)),
                   constant_values=-jnp.inf)
    Ho = (H + 2 - 3) // 2 + 1
    Wo = (W + 2 - 3) // 2 + 1
    taps = []
    for i in range(3):
        for j in range(3):
            s = jax.lax.slice(
                xpad, (0, i, j, 0),
                (N, i + (Ho - 1) * 2 + 1, j + (Wo - 1) * 2 + 1, C),
                (1, 2, 2, 1))
            taps.append(s.reshape(-1))
    stacked = jnp.stack(taps, axis=0)               # (9, L)
    L = N * Ho * Wo * C

    lanes = 128
    rows = pl.cdiv(L, lanes)
    tmb = min(512, _round_up(rows, 8))              # row tile, multiple of 8
    rows_p = _round_up(rows, tmb)
    stacked = jnp.pad(stacked, ((0, 0), (0, rows_p * lanes - L)),
                      constant_values=-jnp.inf)
    st3 = stacked.reshape(9, rows_p, lanes)         # lane-dense slab

    out = pl.pallas_call(
        _max9_kernel,
        out_shape=jax.ShapeDtypeStruct((rows_p, lanes), jnp.float32),
        grid=(rows_p // tmb,),
        in_specs=[pl.BlockSpec((9, tmb, lanes), lambda i: (0, i, 0))],
        out_specs=pl.BlockSpec((tmb, lanes), lambda i: (i, 0)),
        compiler_params=pltpu.CompilerParams(
            dimension_semantics=("parallel",)),
    )(st3)
    return out.reshape(-1)[:L].reshape(N, Ho, Wo, C)


# ----------------------------------------------------------------------------
# Global average pool (glue) + small dedicated Pallas FC kernel.
# ----------------------------------------------------------------------------
def _fc_kernel(x_ref, w_ref, b_ref, o_ref):
    o_ref[...] = (jnp.dot(x_ref[...], w_ref[...],
                          preferred_element_type=jnp.float32) + b_ref[...])


@jax.jit
def gap_fc(x, w, b):
    """x: NHWC f32 -> global average pool over H,W -> linear head."""
    N, H, W, C = x.shape
    feat = x.reshape(N, H * W, C).mean(axis=1)      # tiny XLA glue
    ncls = w.shape[1]
    Np = _round_up(ncls, 128)                       # lane-dense output width
    Mp = _round_up(N, 8)
    feat_p = jnp.pad(feat.astype(jnp.float32), ((0, Mp - N), (0, 0)))
    w_p = jnp.pad(w.astype(jnp.float32), ((0, 0), (0, Np - ncls)))
    b_p = jnp.pad(b.astype(jnp.float32).reshape(1, ncls),
                  ((0, 0), (0, Np - ncls)))
    out = pl.pallas_call(
        _fc_kernel,
        out_shape=jax.ShapeDtypeStruct((Mp, Np), jnp.float32),
        grid=(1,),
        in_specs=[pl.BlockSpec((Mp, C), lambda i: (0, 0)),
                  pl.BlockSpec((C, Np), lambda i: (0, 0)),
                  pl.BlockSpec((1, Np), lambda i: (0, 0))],
        out_specs=pl.BlockSpec((Mp, Np), lambda i: (0, 0)),
    )(feat_p, w_p, b_p)
    return out[:N, :ncls]


# ----------------------------------------------------------------------------
# Deterministic synthetic parameters (ResNet-101 shapes).
# ----------------------------------------------------------------------------
class _KeyGen:
    def __init__(self, seed):
        self._key = jax.random.PRNGKey(seed)
        self._i = 0

    def __call__(self):
        self._i += 1
        return jax.random.fold_in(self._key, self._i)


def _he(key, shape, fan_in):
    return jax.random.normal(key, shape, jnp.float32) * jnp.sqrt(2.0 / fan_in)


def _make_bn(key, c, eps=1e-5):
    kg, kb, km, kv = jax.random.split(key, 4)
    gamma = jax.random.uniform(kg, (c,), jnp.float32, 0.8, 1.2)
    beta = 0.05 * jax.random.normal(kb, (c,), jnp.float32)
    mean = 0.05 * jax.random.normal(km, (c,), jnp.float32)
    var = jax.random.uniform(kv, (c,), jnp.float32, 0.8, 1.2)
    scale = gamma / jnp.sqrt(var + eps)
    bias = beta - mean * scale
    return scale, bias


def make_params(seed=0, num_channels=84, num_classes=4):
    kg = _KeyGen(seed)
    p = {}
    p["conv1_w"] = _he(kg(), (7, 7, num_channels, 64), 7 * 7 * num_channels)
    p["bn1_s"], p["bn1_b"] = _make_bn(kg(), 64)

    layers = []
    inplanes = 64
    for planes, nblocks, stride in zip((64, 128, 256, 512),
                                       (3, 4, 23, 3),
                                       (1, 2, 2, 2)):
        stage = []
        for bi in range(nblocks):
            blk = {"stride": stride if bi == 0 else 1}
            blk["w1"] = _he(kg(), (1, 1, inplanes, planes), inplanes)
            blk["s1"], blk["b1"] = _make_bn(kg(), planes)
            blk["w2"] = _he(kg(), (3, 3, planes, planes), 9 * planes)
            blk["s2"], blk["b2"] = _make_bn(kg(), planes)
            blk["w3"] = _he(kg(), (1, 1, planes, planes * 4), planes)
            blk["s3"], blk["b3"] = _make_bn(kg(), planes * 4)
            if bi == 0:  # downsample branch (channel change and/or stride)
                blk["wd"] = _he(kg(), (1, 1, inplanes, planes * 4), inplanes)
                blk["sd"], blk["bd"] = _make_bn(kg(), planes * 4)
            stage.append(blk)
            inplanes = planes * 4
        layers.append(stage)
    p["layers"] = layers

    p["fc_w"] = _he(kg(), (2048, num_classes), 2048)  # stored as (in, out)
    p["fc_b"] = jax.random.uniform(kg(), (num_classes,), jnp.float32,
                                   -0.05, 0.05)
    return p


# ----------------------------------------------------------------------------
# Forward pass.
# ----------------------------------------------------------------------------
def _bottleneck(x, blk):
    stride = blk["stride"]
    out = conv2d_bn(x, blk["w1"], blk["s1"], blk["b1"],
                    stride=1, pad=0, relu=True)
    out = conv2d_bn(out, blk["w2"], blk["s2"], blk["b2"],
                    stride=stride, pad=1, relu=True)
    if "wd" in blk:
        idn = conv2d_bn(x, blk["wd"], blk["sd"], blk["bd"],
                        stride=stride, pad=0, relu=False)
    else:
        idn = x
    # Last 1x1 conv with BN + residual add + ReLU fused into the matmul epilogue.
    out = conv2d_bn(out, blk["w3"], blk["s3"], blk["b3"],
                    stride=1, pad=0, relu=True, residual=idn)
    return out


def resnet101_forward(params, x_nchw):
    # NCHW (PyTorch) -> NHWC (internal layout)
    x = jnp.transpose(x_nchw.astype(jnp.float32), (0, 2, 3, 1))
    x = conv2d_bn(x, params["conv1_w"], params["bn1_s"], params["bn1_b"],
                  stride=2, pad=3, relu=True)
    x = maxpool_3x3_s2(x)
    for stage in params["layers"]:
        for blk in stage:
            x = _bottleneck(x, blk)
    return gap_fc(x, params["fc_w"], params["fc_b"])


# ----------------------------------------------------------------------------
if __name__ == "__main__":
    key = jax.random.PRNGKey(0)
    # NCHW input, 84 channels, small 32x32 spatial (->1x1 before avgpool).
    x = jax.random.normal(key, (2, 84, 32, 32), jnp.float32)
    params = make_params(seed=0, num_channels=84, num_classes=4)

    logits = resnet101_forward(params, x)
    logits = jax.block_until_ready(logits)

    assert logits.shape == (2, 4), logits.shape
    assert bool(jnp.all(jnp.isfinite(logits)))
    print("KERNEL_OK")
</pallas_src>

<mosaic_0001>
module attributes {stable_mosaic.version = 11 : i64} {
  func.func @_fused_matmul_kernel(%arg0: i32, %arg1: i32, %arg2: i32, %arg3: memref<256x128xbf16, #tpu.memory_space<vmem>>, %arg4: memref<128x128xbf16, #tpu.memory_space<vmem>>, %arg5: memref<1x128xf32, #tpu.memory_space<vmem>>, %arg6: memref<1x128xf32, #tpu.memory_space<vmem>>, %arg7: memref<256x128xf32, #tpu.memory_space<vmem>>, %arg8: memref<256x128xf32, #tpu.memory_space<vmem>>) attributes {dimension_semantics = [#tpu.dimension_semantics<parallel>, #tpu.dimension_semantics<parallel>, #tpu.dimension_semantics<arbitrary>], iteration_bounds = array<i64: 2, 1, 33>, scalar_prefetch = 0 : i64, scratch_operands = 1 : i64, tpu.core_type = #tpu.core_type<tc>, window_params = [{transform_indices = @transform_0, window_bounds = array<i64: 256, 128>}, {transform_indices = @transform_1, window_bounds = array<i64: 128, 128>}, {transform_indices = @transform_2, window_bounds = array<i64: 1, 128>}, {transform_indices = @transform_3, window_bounds = array<i64: 1, 128>}, {transform_indices = @transform_4, window_bounds = array<i64: 256, 128>}]} {
    %c0_i32 = arith.constant 0 : i32
    %0 = arith.cmpi eq, %arg2, %c0_i32 : i32
    %1 = arith.extui %0 : i1 to i32
    %c0_i32_0 = arith.constant 0 : i32
    %2 = arith.cmpi ne, %1, %c0_i32_0 : i32
    scf.if %2 {
      %cst_9 = arith.constant 0.000000e+00 : f32
      %12 = vector.broadcast %cst_9 : f32 to vector<256x128xf32>
      %c0_10 = arith.constant 0 : index
      %c0_11 = arith.constant 0 : index
      %13 = vector.load %arg8[%c0_10, %c0_11] : memref<256x128xf32, #tpu.memory_space<vmem>>, vector<256x128xf32>
      tpu.vector_store %arg8[%c0_10, %c0_11], %12 {strides = array<i32>} : memref<256x128xf32, #tpu.memory_space<vmem>>, vector<256x128xf32>,
    } else {
    }
    %c0 = arith.constant 0 : index
    %c0_1 = arith.constant 0 : index
    %3 = vector.load %arg8[%c0, %c0_1] : memref<256x128xf32, #tpu.memory_space<vmem>>, vector<256x128xf32>
    %c0_2 = arith.constant 0 : index
    %c0_3 = arith.constant 0 : index
    %4 = vector.load %arg3[%c0_2, %c0_3] : memref<256x128xbf16, #tpu.memory_space<vmem>>, vector<256x128xbf16>
    %c0_4 = arith.constant 0 : index
    %c0_5 = arith.constant 0 : index
    %5 = vector.load %arg4[%c0_4, %c0_5] : memref<128x128xbf16, #tpu.memory_space<vmem>>, vector<128x128xbf16>
    %cst = arith.constant dense<0.000000e+00> : vector<256x128xf32>
    %6 = tpu.matmul %4, %5, %cst {dimension_numbers = #tpu.dot_dimension_numbers<[1], [0], [0], [1], [0, 0, 1, 1], [], []>} : vector<256x128xbf16>, vector<128x128xbf16>, vector<256x128xf32> -> vector<256x128xf32>
    %7 = arith.addf %3, %6 : vector<256x128xf32>
    %c0_6 = arith.constant 0 : index
    %c0_7 = arith.constant 0 : index
    %8 = vector.load %arg8[%c0_6, %c0_7] : memref<256x128xf32, #tpu.memory_space<vmem>>, vector<256x128xf32>
    tpu.vector_store %arg8[%c0_6, %c0_7], %7 {strides = array<i32>} : memref<256x128xf32, #tpu.memory_space<vmem>>, vector<256x128xf32>,
    %c32_i32 = arith.constant 32 : i32
    %9 = arith.cmpi eq, %arg2, %c32_i32 : i32
    %10 = arith.extui %9 : i1 to i32
    %c0_i32_8 = arith.constant 0 : i32
    %11 = arith.cmpi ne, %10, %c0_i32_8 : i32
    scf.if %11 {
      %c0_9 = arith.constant 0 : index
      %c0_10 = arith.constant 0 : index
      %12 = vector.load %arg8[%c0_9, %c0_10] : memref<256x128xf32, #tpu.memory_space<vmem>>, vector<256x128xf32>
      %c0_11 = arith.constant 0 : index
      %c0_12 = arith.constant 0 : index
      %13 = vector.load %arg5[%c0_11, %c0_12] : memref<1x128xf32, #tpu.memory_space<vmem>>, vector<1x128xf32>
      %14 = vector.broadcast %13 : vector<1x128xf32> to vector<256x128xf32>
      %15 = arith.mulf %12, %14 : vector<256x128xf32>
      %c0_13 = arith.constant 0 : index
      %c0_14 = arith.constant 0 : index
      %16 = vector.load %arg6[%c0_13, %c0_14] : memref<1x128xf32, #tpu.memory_space<vmem>>, vector<1x128xf32>
      %17 = vector.broadcast %16 : vector<1x128xf32> to vector<256x128xf32>
      %18 = arith.addf %15, %17 : vector<256x128xf32>
      %cst_15 = arith.constant 0.000000e+00 : f32
      %19 = vector.broadcast %cst_15 : f32 to vector<256x128xf32>
      %20 = arith.maximumf %18, %19 : vector<256x128xf32>
      %c0_16 = arith.constant 0 : index
      %c0_17 = arith.constant 0 : index
      %21 = vector.load %arg7[%c0_16, %c0_17] : memref<256x128xf32, #tpu.memory_space<vmem>>, vector<256x128xf32>
      tpu.vector_store %arg7[%c0_16, %c0_17], %20 {strides = array<i32>} : memref<256x128xf32, #tpu.memory_space<vmem>>, vector<256x128xf32>,
    } else {
    }
    return
  }
  func.func @transform_0(%arg0: i32, %arg1: i32, %arg2: i32) -> (i32, i32) {
    %c0_i32 = arith.constant 0 : i32
    return %arg0, %arg2 : i32, i32
  }
  func.func @transform_1(%arg0: i32, %arg1: i32, %arg2: i32) -> (i32, i32) {
    %c0_i32 = arith.constant 0 : i32
    return %arg2, %arg1 : i32, i32
  }
  func.func @transform_2(%arg0: i32, %arg1: i32, %arg2: i32) -> (i32, i32) {
    %c0_i32 = arith.constant 0 : i32
    %c0_i32_0 = arith.constant 0 : i32
    return %c0_i32, %arg1 : i32, i32
  }
  func.func @transform_3(%arg0: i32, %arg1: i32, %arg2: i32) -> (i32, i32) {
    %c0_i32 = arith.constant 0 : i32
    %c0_i32_0 = arith.constant 0 : i32
    return %c0_i32, %arg1 : i32, i32
  }
  func.func @transform_4(%arg0: i32, %arg1: i32, %arg2: i32) -> (i32, i32) {
    %c0_i32 = arith.constant 0 : i32
    return %arg0, %arg1 : i32, i32
  }
}

</mosaic_0001>

<llo_original>
// kernel: _fused_matmul.1
$region0: #{_fused_matmul.1}
  #allocation0 [shape = 'u32[]', space=smem, size = 0x4, offset = 0x4, fixed_abs, tag = 'smem constant byte address 0x4 - core index']
  #allocation1 [shape = 'u32[144,128]{1,0:T(1,128)}', space=vmem, size = 0x12000, scoped, tag = 'internal scratch']
  #allocation2 [shape = 'f32[256,128]{1,0:T(8,128)}', space=vmem, size = 0x20000, scoped, tag = 'scratch operand']
  %s0 = inlined_call_operand.vmem [shape: bf16[512,4224], index: 0, kind: input, shape index: {}]
  %s1 = inlined_call_operand.vmem [shape: bf16[4224,128], index: 1, kind: input, shape index: {}]
  %s2 = inlined_call_operand.vmem [shape: f32[1,128], index: 2, kind: input, shape index: {}]
  %s3 = inlined_call_operand.vmem [shape: f32[1,128], index: 3, kind: input, shape index: {}]
  %s4 = inlined_call_operand.vmem [shape: f32[512,128], index: 4, kind: output, shape index: {}]
  %s5 = sld [smem:[#allocation0]]
  $region98: #{_fused_matmul.1} parent=0
    _
  %s7 = ssub.s32 1, %s5
  %s8 = scalar_select 0, %s7, %s5
  $region1: #{_fused_matmul.1} parent=0
    #allocation3 [shape = 'u8[131072]{0}', space=vmem, size = 0x20000, scoped, tag = 'input window, operand 0']
    loop: start=0, step=1, limit=68
    $region2: #{_fused_matmul.1} parent=1 // loop_pre_header
      _
    $region3: #{_fused_matmul.1} parent=1 // loop_header
      %s10 = sphi 0, %s14
      %p11 = scmp.ge.s32.totalorder %s10, 68
      %s17 = sphi 0, %s36
      %s18 = sphi 0, %s32
      %s19 = sphi 0, %s28
      %s20 = sphi 0, %s17
      %s21 = sphi 0, %s18
      %s22 = sphi 0, %s19
      %s23 = sphi 0, %s20
      %s24 = sphi 0, %s21
      %s25 = sphi 0, %s22
      %s41 = sphi 0, %s43
      %s44 = sphi 0, %s41
      %s45 = sphi 0, %s44
      %s61 = sphi 0, %s45
      %s69 = sphi 0, %s71
      %s72 = sphi 0, %s69
      %s73 = sphi 0, %s72
      %s89 = sphi 0, %s73
      %s95 = sphi 0, %s97
      %s98 = sphi 0, %s95
      %s99 = sphi 0, %s98
      %s115 = sphi 0, %s99
      %s121 = sphi 0, %s123
      %s124 = sphi 0, %s121
      %s125 = sphi 0, %s124
      %s141 = sphi 0, %s125
      %s149 = sphi 0, %s151
      %s152 = sphi 0, %s149
      %s153 = sphi 0, %s152
      %s169 = sphi 0, %s153
    $region4: #{_fused_matmul.1} parent=1 // loop_header_branch
      %13 = sbr.rel (%p11) target = $region8
    $region5: #{_fused_matmul.1} parent=1 // loop_body
      %s15 = ssub.s32 %s10, 1
      %s16 = ssub.s32 %s10, 2
      %s26 = sadd.s32 1, %s19
      %p27 = scmp.ge.s32.totalorder %s26, 33
      %s28 = scalar_select %p27, 0, %s26
      %s29 = sadd.s32 1, %s18
      %s30 = scalar_select %p27, %s29, %s18
      %p31 = scmp.ge.s32.totalorder %s30, 1
      %s32 = scalar_select %p31, 0, %s30
      %s33 = sadd.s32 1, %s17
      %s34 = scalar_select %p31, %s33, %s17
      %p35 = scmp.ge.s32.totalorder %s34, 2
      %s36 = scalar_select %p35, 0, %s34
      %s37 = ssub.s32 %s17, %s36
      %s38 = ssub.s32 %s19, %s28
      %s39 = sor.u32 %s37, %s38
      %p40 = scmp.eq.s32.totalorder %s39, 0
      %s42 = sadd.s32 %s41, 1
      %s43 = scalar_select %p40, %s41, %s42
      %p46 = pneg %p40
      %p47 = scmp.eq.s32.totalorder %s10, 65
      %p48 = por %p46, %p47
      %p49 = scmp.ne.s32.totalorder %s41, %s44
      %p50 = scmp.eq.s32.totalorder %s10, 0
      %p51 = por %p49, %p50
      %p52 = scmp.ne.s32.totalorder %s41, %s44
      %p53 = scmp.eq.s32.totalorder %s15, 65
      %p54 = por %p52, %p53
      %p55 = scmp.ne.s32.totalorder %s44, %s45
      %p56 = scmp.eq.s32.totalorder %s15, 0
      %p57 = por %p55, %p56
      %p58 = scmp.ne.s32.totalorder %s44, %s45
      %p59 = scmp.eq.s32.totalorder %s16, 65
      %p60 = por %p58, %p59
      %p62 = scmp.ne.s32.totalorder %s45, %s61
      %p63 = scmp.eq.s32.totalorder %s16, 0
      %p64 = por %p62, %p63
      %s65 = ssub.s32 %s19, %s28
      %s66 = ssub.s32 %s18, %s32
      %s67 = sor.u32 %s65, %s66
      %p68 = scmp.eq.s32.totalorder %s67, 0
      %s70 = sadd.s32 %s69, 1
      %s71 = scalar_select %p68, %s69, %s70
      %p74 = pneg %p68
      %p75 = scmp.eq.s32.totalorder %s10, 65
      %p76 = por %p74, %p75
      %p77 = scmp.ne.s32.totalorder %s69, %s72
      %p78 = scmp.eq.s32.totalorder %s10, 0
      %p79 = por %p77, %p78
      %p80 = scmp.ne.s32.totalorder %s69, %s72
      %p81 = scmp.eq.s32.totalorder %s15, 65
      %p82 = por %p80, %p81
      %p83 = scmp.ne.s32.totalorder %s72, %s73
      %p84 = scmp.eq.s32.totalorder %s15, 0
      %p85 = por %p83, %p84
      %p86 = scmp.ne.s32.totalorder %s72, %s73
      %p87 = scmp.eq.s32.totalorder %s16, 65
      %p88 = por %p86, %p87
      %p90 = scmp.ne.s32.totalorder %s73, %s89
      %p91 = scmp.eq.s32.totalorder %s16, 0
      %p92 = por %p90, %p91
      %s93 = ssub.s32 %s18, %s32
      %p94 = scmp.eq.s32.totalorder %s93, 0
      %s96 = sadd.s32 %s95, 1
      %s97 = scalar_select %p94, %s95, %s96
      %p100 = pneg %p94
      %p101 = scmp.eq.s32.totalorder %s10, 65
      %p102 = por %p100, %p101
      %p103 = scmp.ne.s32.totalorder %s95, %s98
      %p104 = scmp.eq.s32.totalorder %s10, 0
      %p105 = por %p103, %p104
      %p106 = scmp.ne.s32.totalorder %s95, %s98
      %p107 = scmp.eq.s32.totalorder %s15, 65
      %p108 = por %p106, %p107
      %p109 = scmp.ne.s32.totalorder %s98, %s99
      %p110 = scmp.eq.s32.totalorder %s15, 0
      %p111 = por %p109, %p110
      %p112 = scmp.ne.s32.totalorder %s98, %s99
      %p113 = scmp.eq.s32.totalorder %s16, 65
      %p114 = por %p112, %p113
      %p116 = scmp.ne.s32.totalorder %s99, %s115
      %p117 = scmp.eq.s32.totalorder %s16, 0
      %p118 = por %p116, %p117
      %s119 = ssub.s32 %s18, %s32
      %p120 = scmp.eq.s32.totalorder %s119, 0
      %s122 = sadd.s32 %s121, 1
      %s123 = scalar_select %p120, %s121, %s122
      %p126 = pneg %p120
      %p127 = scmp.eq.s32.totalorder %s10, 65
      %p128 = por %p126, %p127
      %p129 = scmp.ne.s32.totalorder %s121, %s124
      %p130 = scmp.eq.s32.totalorder %s10, 0
      %p131 = por %p129, %p130
      %p132 = scmp.ne.s32.totalorder %s121, %s124
      %p133 = scmp.eq.s32.totalorder %s15, 65
      %p134 = por %p132, %p133
      %p135 = scmp.ne.s32.totalorder %s124, %s125
      %p136 = scmp.eq.s32.totalorder %s15, 0
      %p137 = por %p135, %p136
      %p138 = scmp.ne.s32.totalorder %s124, %s125
      %p139 = scmp.eq.s32.totalorder %s16, 65
      %p140 = por %p138, %p139
      %p142 = scmp.ne.s32.totalorder %s125, %s141
      %p143 = scmp.eq.s32.totalorder %s16, 0
      %p144 = por %p142, %p143
      %s145 = ssub.s32 %s17, %s36
      %s146 = ssub.s32 %s18, %s32
      %s147 = sor.u32 %s145, %s146
      %p148 = scmp.eq.s32.totalorder %s147, 0
      %s150 = sadd.s32 %s149, 1
      %s151 = scalar_select %p148, %s149, %s150
      %p154 = pneg %p148
      %p155 = scmp.eq.s32.totalorder %s10, 65
      %p156 = por %p154, %p155
      %p157 = scmp.ne.s32.totalorder %s149, %s152
      %p158 = scmp.eq.s32.totalorder %s10, 0
      %p159 = por %p157, %p158
      %p160 = scmp.ne.s32.totalorder %s149, %s152
      %p161 = scmp.eq.s32.totalorder %s15, 65
      %p162 = por %p160, %p161
      %p163 = scmp.ne.s32.totalorder %s152, %s153
      %p164 = scmp.eq.s32.totalorder %s15, 0
      %p165 = por %p163, %p164
      %p166 = scmp.ne.s32.totalorder %s152, %s153
      %p167 = scmp.eq.s32.totalorder %s16, 65
      %p168 = por %p166, %p167
      %p170 = scmp.ne.s32.totalorder %s153, %s169
      %p171 = scmp.eq.s32.totalorder %s16, 0
      %p172 = por %p170, %p171
      %p173 = scmp.le.s32.totalorder 1, %s10
      %p174 = scmp.lt.s32.totalorder %s10, 67
      %p175 = pnand %p173, %p174
      %p176 = pneg %p175
      // Predicated region
      $region9: #{_fused_matmul.1} parent=5 // pred_check
        _
      $region10: #{_fused_matmul.1} parent=5 // pred_check_branch
        %178 = sbr.rel (%p175) target = $region12
      $region11: #{_fused_matmul.1} parent=5 // pred_region
        %s179 = ssub.s32 %s10, 1
        // Predicated region
        $region13: #{_fused_matmul.1} parent=11 // pred_check
          %p180 = pneg %p111
        $region14: #{_fused_matmul.1} parent=11 // pred_check_branch
          %182 = sbr.rel (%p180) target = $region16
        $region15: #{_fused_matmul.1} parent=11 // pred_region
          %p183 = scmp.lt.s32.totalorder %s21, 0
          %s184 = scalar_select %p183, %s21, 0
          %s185 = scalar_lea.vmem %s2, %s184
        $region16: #{_fused_matmul.1} parent=11 // pred_fallthru
          _
        // Predicated region
        $region17: #{_fused_matmul.1} parent=11 // pred_check
          %p186 = pneg %p137
        $region18: #{_fused_matmul.1} parent=11 // pred_check_branch
          %188 = sbr.rel (%p186) target = $region20
        $region19: #{_fused_matmul.1} parent=11 // pred_region
          %p189 = scmp.lt.s32.totalorder %s21, 0
          %s190 = scalar_select %p189, %s21, 0
          %s191 = scalar_lea.vmem %s3, %s190
        $region20: #{_fused_matmul.1} parent=11 // pred_fallthru
          _
      $region12: #{_fused_matmul.1} parent=5 // pred_fallthru
        _
      %p192 = scmp.lt.s32.totalorder %s10, 66
      // Predicated region
      $region21: #{_fused_matmul.1} parent=5 // pred_check
        %p193 = pneg %p192
      $region22: #{_fused_matmul.1} parent=5 // pred_check_branch
        %195 = sbr.rel (%p193) target = $region24
      $region23: #{_fused_matmul.1} parent=5 // pred_region
        // Predicated region
        $region25: #{_fused_matmul.1} parent=23 // pred_check
          %p196 = pneg %p51
        $region26: #{_fused_matmul.1} parent=23 // pred_check_branch
          %198 = sbr.rel (%p196) target = $region28
        $region27: #{_fused_matmul.1} parent=23 // pred_region
          %s199 = sand.u32 %s41, 1
          %s200 = sand.u32 %s41, 1
          %s201 = smul.addr %s200, 128
          %s202 = scalar_lea.vmem [#allocation3], %s201
          %s203 = smul.u32 32, %s17
          %s204 = smul.addr %s203, 33
          %s205 = sadd.s32 %s19, %s204
          %s206 = smul.addr %s205, 4
          %s207 = scalar_lea.vmem %s0, %s206
          // Predicated region
          $region29: #{_fused_matmul.1} parent=27 // pred_check
            _
          $region30: #{_fused_matmul.1} parent=27 // pred_check_branch
            %209 = sbr.rel (0) target = $region32
          $region31: #{_fused_matmul.1} parent=27 // pred_region
            // Predicated region
            $region33: #{_fused_matmul.1} parent=31 // pred_check
              _
            $region34: #{_fused_matmul.1} parent=31 // pred_check_branch
              %211 = sbr.rel target = $region36
            $region35: #{_fused_matmul.1} parent=31 // pred_region
              // Predicated region
              $region48: #{_fused_matmul.1} parent=35 // pred_check
                _
              $region49: #{_fused_matmul.1} parent=35 // pred_check_branch
                %288 = sbr.rel (0) target = $region51
              $region50: #{_fused_matmul.1} parent=35 // pred_region
                loop: start=0, step=1, limit=1
                $region52: #{_fused_matmul.1} parent=50 // loop_pre_header
                  _
                $region53: #{_fused_matmul.1} parent=50 // loop_header
                  %s290 = sphi 0, %s294
                  %p291 = scmp.ge.s32.totalorder %s290, 1
                  %s295 = sphi %s207, %s207
                  %s296 = sphi %s202, %s202
                $region54: #{_fused_matmul.1} parent=50 // loop_header_branch
                  %293 = sbr.rel (%p291) target = $region58
                $region55: #{_fused_matmul.1} parent=50 // loop_body
                  _
                $region56: #{_fused_matmul.1} parent=50 // loop_footer
                  %s294 = sadd.s32 1, %s290
                $region57: #{_fused_matmul.1} parent=50 // loop_footer_branch
                  %289 = sbr.rel target = $region53
                $region58: #{_fused_matmul.1} parent=50 // loop_exit
                  _
                loop: start=0, step=1, limit=1
                $region59: #{_fused_matmul.1} parent=50 // loop_pre_header
                  _
                $region60: #{_fused_matmul.1} parent=50 // loop_header
                  %s299 = sphi 0, %s303
                  %p300 = scmp.ge.s32.totalorder %s299, 1
                  %s304 = sphi %s207, %s207
                  %s305 = sphi %s202, %s202
                $region61: #{_fused_matmul.1} parent=50 // loop_header_branch
                  %302 = sbr.rel (%p300) target = $region65
                $region62: #{_fused_matmul.1} parent=50 // loop_body
                  %v306 = vld [vmem:[%s304] sm:$0xf]
                  %307 = vst [vmem:[%s305] sm:$0xf] %v306
                  %v308 = vld [vmem:[%s304 + $0x84] sm:$0xf]
                  %309 = vst [vmem:[%s305 + $0x4] sm:$0xf] %v308
                  %v310 = vld [vmem:[%s304 + $0x108] sm:$0xf]
                  %311 = vst [vmem:[%s305 + $0x8] sm:$0xf] %v310
                  %v312 = vld [vmem:[%s304 + $0x18c] sm:$0xf]
                  %313 = vst [vmem:[%s305 + $0xc] sm:$0xf] %v312
                  %v314 = vld [vmem:[%s304 + $0x210] sm:$0xf]
                  %315 = vst [vmem:[%s305 + $0x10] sm:$0xf] %v314
                  %v316 = vld [vmem:[%s304 + $0x294] sm:$0xf]
                  %317 = vst [vmem:[%s305 + $0x14] sm:$0xf] %v316
                  %v318 = vld [vmem:[%s304 + $0x318] sm:$0xf]
                  %319 = vst [vmem:[%s305 + $0x18] sm:$0xf] %v318
                  %v320 = vld [vmem:[%s304 + $0x39c] sm:$0xf]
                  %321 = vst [vmem:[%s305 + $0x1c] sm:$0xf] %v320
                  %v322 = vld [vmem:[%s304 + $0x420] sm:$0xf]
                  %323 = vst [vmem:[%s305 + $0x20] sm:$0xf] %v322
                  %v324 = vld [vmem:[%s304 + $0x4a4] sm:$0xf]
                  %325 = vst [vmem:[%s305 + $0x24] sm:$0xf] %v324
                  %v326 = vld [vmem:[%s304 + $0x528] sm:$0xf]
                  %327 = vst [vmem:[%s305 + $0x28] sm:$0xf] %v326
                  %v328 = vld [vmem:[%s304 + $0x5ac] sm:$0xf]
                  %329 = vst [vmem:[%s305 + $0x2c] sm:$0xf] %v328
                  %v330 = vld [vmem:[%s304 + $0x630] sm:$0xf]
                  %331 = vst [vmem:[%s305 + $0x30] sm:$0xf] %v330
                  %v332 = vld [vmem:[%s304 + $0x6b4] sm:$0xf]
                  %333 = vst [vmem:[%s305 + $0x34] sm:$0xf] %v332
                  %v334 = vld [vmem:[%s304 + $0x738] sm:$0xf]
                  %335 = vst [vmem:[%s305 + $0x38] sm:$0xf] %v334
                  %v336 = vld [vmem:[%s304 + $0x7bc] sm:$0xf]
                  %337 = vst [vmem:[%s305 + $0x3c] sm:$0xf] %v336
                  %v338 = vld [vmem:[%s304 + $0x840] sm:$0xf]
                  %339 = vst [vmem:[%s305 + $0x40] sm:$0xf] %v338
                  %v340 = vld [vmem:[%s304 + $0x8c4] sm:$0xf]
                  %341 = vst [vmem:[%s305 + $0x44] sm:$0xf] %v340
                  %v342 = vld [vmem:[%s304 + $0x948] sm:$0xf]
                  %343 = vst [vmem:[%s305 + $0x48] sm:$0xf] %v342
                  %v344 = vld [vmem:[%s304 + $0x9cc] sm:$0xf]
                  %345 = vst [vmem:[%s305 + $0x4c] sm:$0xf] %v344
                  %v346 = vld [vmem:[%s304 + $0xa50] sm:$0xf]
                  %347 = vst [vmem:[%s305 + $0x50] sm:$0xf] %v346
                  %v348 = vld [vmem:[%s304 + $0xad4] sm:$0xf]
                  %349 = vst [vmem:[%s305 + $0x54] sm:$0xf] %v348
                  %v350 = vld [vmem:[%s304 + $0xb58] sm:$0xf]
                  %351 = vst [vmem:[%s305 + $0x58] sm:$0xf] %v350
                  %v352 = vld [vmem:[%s304 + $0xbdc] sm:$0xf]
                  %353 = vst [vmem:[%s305 + $0x5c] sm:$0xf] %v352
                  %v354 = vld [vmem:[%s304 + $0xc60] sm:$0xf]
                  %355 = vst [vmem:[%s305 + $0x60] sm:$0xf] %v354
                  %v356 = vld [vmem:[%s304 + $0xce4] sm:$0xf]
                  %357 = vst [vmem:[%s305 + $0x64] sm:$0xf] %v356
                  %v358 = vld [vmem:[%s304 + $0xd68] sm:$0xf]
                  %359 = vst [vmem:[%s305 + $0x68] sm:$0xf] %v358
                  %v360 = vld [vmem:[%s304 + $0xdec] sm:$0xf]
                  %361 = vst [vmem:[%s305 + $0x6c] sm:$0xf] %v360
                  %v362 = vld [vmem:[%s304 + $0xe70] sm:$0xf]
                  %363 = vst [vmem:[%s305 + $0x70] sm:$0xf] %v362
                  %v364 = vld [vmem:[%s304 + $0xef4] sm:$0xf]
                  %365 = vst [vmem:[%s305 + $0x74] sm:$0xf] %v364
                  %v366 = vld [vmem:[%s304 + $0xf78] sm:$0xf]
                  %367 = vst [vmem:[%s305 + $0x78] sm:$0xf] %v366
                  %v368 = vld [vmem:[%s304 + $0xffc] sm:$0xf]
                  %369 = vst [vmem:[%s305 + $0x7c] sm:$0xf] %v368
                $region63: #{_fused_matmul.1} parent=50 // loop_footer
                  %s303 = sadd.s32 1, %s299
                $region64: #{_fused_matmul.1} parent=50 // loop_footer_branch
                  %298 = sbr.rel target = $region60
                $region65: #{_fused_matmul.1} parent=50 // loop_exit
                  _
              $region51: #{_fused_matmul.1} parent=35 // pred_fallthru
                _
            $region36: #{_fused_matmul.1} parent=31 // pred_fallthru
              _
            // Predicated region
            $region37: #{_fused_matmul.1} parent=31 // pred_check
              _
            $region38: #{_fused_matmul.1} parent=31 // pred_check_branch
              %213 = sbr.rel (0) target = $region40
            $region39: #{_fused_matmul.1} parent=31 // pred_region
              loop: start=0, step=1, limit=1
              $region41: #{_fused_matmul.1} parent=39 // loop_pre_header
                _
              $region42: #{_fused_matmul.1} parent=39 // loop_header
                %s216 = sphi 0, %s220
                %p217 = scmp.ge.s32.totalorder %s216, 1
                %s221 = sphi %s207, %s207
                %s222 = sphi %s202, %s202
              $region43: #{_fused_matmul.1} parent=39 // loop_header_branch
                %219 = sbr.rel (%p217) target = $region47
              $region44: #{_fused_matmul.1} parent=39 // loop_body
                %v223 = vld [vmem:[%s221] sm:$0xf]
                %224 = vst [vmem:[%s222] sm:$0xf] %v223
                %v225 = vld [vmem:[%s221 + $0x84] sm:$0xf]
                %226 = vst [vmem:[%s222 + $0x4] sm:$0xf] %v225
                %v227 = vld [vmem:[%s221 + $0x108] sm:$0xf]
                %228 = vst [vmem:[%s222 + $0x8] sm:$0xf] %v227
                %v229 = vld [vmem:[%s221 + $0x18c] sm:$0xf]
                %230 = vst [vmem:[%s222 + $0xc] sm:$0xf] %v229
                %v231 = vld [vmem:[%s221 + $0x210] sm:$0xf]
                %232 = vst [vmem:[%s222 + $0x10] sm:$0xf] %v231
                %v233 = vld [vmem:[%s221 + $0x294] sm:$0xf]
                %234 = vst [vmem:[%s222 + $0x14] sm:$0xf] %v233
                %v235 = vld [vmem:[%s221 + $0x318] sm:$0xf]
                %236 = vst [vmem:[%s222 + $0x18] sm:$0xf] %v235
                %v237 = vld [vmem:[%s221 + $0x39c] sm:$0xf]
                %238 = vst [vmem:[%s222 + $0x1c] sm:$0xf] %v237
                %v239 = vld [vmem:[%s221 + $0x420] sm:$0xf]
                %240 = vst [vmem:[%s222 + $0x20] sm:$0xf] %v239
                %v241 = vld [vmem:[%s221 + $0x4a4] sm:$0xf]
                %242 = vst [vmem:[%s222 + $0x24] sm:$0xf] %v241
                %v243 = vld [vmem:[%s221 + $0x528] sm:$0xf]
                %244 = vst [vmem:[%s222 + $0x28] sm:$0xf] %v243
                %v245 = vld [vmem:[%s221 + $0x5ac] sm:$0xf]
                %246 = vst [vmem:[%s222 + $0x2c] sm:$0xf] %v245
                %v247 = vld [vmem:[%s221 + $0x630] sm:$0xf]
                %248 = vst [vmem:[%s222 + $0x30] sm:$0xf] %v247
                %v249 = vld [vmem:[%s221 + $0x6b4] sm:$0xf]
                %250 = vst [vmem:[%s222 + $0x34] sm:$0xf] %v249
                %v251 = vld [vmem:[%s221 + $0x738] sm:$0xf]
                %252 = vst [vmem:[%s222 + $0x38] sm:$0xf] %v251
                %v253 = vld [vmem:[%s221 + $0x7bc] sm:$0xf]
                %254 = vst [vmem:[%s222 + $0x3c] sm:$0xf] %v253
                %v255 = vld [vmem:[%s221 + $0x840] sm:$0xf]
                %256 = vst [vmem:[%s222 + $0x40] sm:$0xf] %v255
                %v257 = vld [vmem:[%s221 + $0x8c4] sm:$0xf]
                %258 = vst [vmem:[%s222 + $0x44] sm:$0xf] %v257
                %v259 = vld [vmem:[%s221 + $0x948] sm:$0xf]
                %260 = vst [vmem:[%s222 + $0x48] sm:$0xf] %v259
                %v261 = vld [vmem:[%s221 + $0x9cc] sm:$0xf]
                %262 = vst [vmem:[%s222 + $0x4c] sm:$0xf] %v261
                %v263 = vld [vmem:[%s221 + $0xa50] sm:$0xf]
                %264 = vst [vmem:[%s222 + $0x50] sm:$0xf] %v263
                %v265 = vld [vmem:[%s221 + $0xad4] sm:$0xf]
                %266 = vst [vmem:[%s222 + $0x54] sm:$0xf] %v265
                %v267 = vld [vmem:[%s221 + $0xb58] sm:$0xf]
                %268 = vst [vmem:[%s222 + $0x58] sm:$0xf] %v267
                %v269 = vld [vmem:[%s221 + $0xbdc] sm:$0xf]
                %270 = vst [vmem:[%s222 + $0x5c] sm:$0xf] %v269
                %v271 = vld [vmem:[%s221 + $0xc60] sm:$0xf]
                %272 = vst [vmem:[%s222 + $0x60] sm:$0xf] %v271
                %v273 = vld [vmem:[%s221 + $0xce4] sm:$0xf]
                %274 = vst [vmem:[%s222 + $0x64] sm:$0xf] %v273
                %v275 = vld [vmem:[%s221 + $0xd68] sm:$0xf]
                %276 = vst [vmem:[%s222 + $0x68] sm:$0xf] %v275
                %v277 = vld [vmem:[%s221 + $0xdec] sm:$0xf]
                %278 = vst [vmem:[%s222 + $0x6c] sm:$0xf] %v277
                %v279 = vld [vmem:[%s221 + $0xe70] sm:$0xf]
                %280 = vst [vmem:[%s222 + $0x70] sm:$0xf] %v279
                %v281 = vld [vmem:[%s221 + $0xef4] sm:$0xf]
                %282 = vst [vmem:[%s222 + $0x74] sm:$0xf] %v281
                %v283 = vld [vmem:[%s221 + $0xf78] sm:$0xf]
                %284 = vst [vmem:[%s222 + $0x78] sm:$0xf] %v283
                %v285 = vld [vmem:[%s221 + $0xffc] sm:$0xf]
                %286 = vst [vmem:[%s222 + $0x7c] sm:$0xf] %v285
              $region45: #{_fused_matmul.1} parent=39 // loop_footer
                %s220 = sadd.s32 1, %s216
              $region46: #{_fused_matmul.1} parent=39 // loop_footer_branch
                %215 = sbr.rel target = $region42
              $region47: #{_fused_matmul.1} parent=39 // loop_exit
                _
            $region40: #{_fused_matmul.1} parent=31 // pred_fallthru
              _
          $region32: #{_fused_matmul.1} parent=27 // pred_fallthru
            _
          %370 = vnop
        $region28: #{_fused_matmul.1} parent=23 // pred_fallthru
          _
        // Predicated region
        $region66: #{_fused_matmul.1} parent=23 // pred_check
          %p371 = pneg %p79
        $region67: #{_fused_matmul.1} parent=23 // pred_check_branch
          %373 = sbr.rel (%p371) target = $region69
        $region68: #{_fused_matmul.1} parent=23 // pred_region
          %s374 = smul.u32 16, %s19
          %p375 = scmp.lt.s32.totalorder %s374, 527
          %s376 = scalar_select %p375, %s374, 527
          %p377 = scmp.lt.s32.totalorder %s18, 0
          %s378 = scalar_select %p377, %s18, 0
          %s379 = sadd.s32 %s378, %s376
          %s380 = smul.addr %s379, 4
          %s381 = scalar_lea.vmem %s1, %s380
          %s382 = smul.u32 16, %s19
        $region69: #{_fused_matmul.1} parent=23 // pred_fallthru
          _
      $region24: #{_fused_matmul.1} parent=5 // pred_fallthru
        _
      %p383 = scmp.le.s32.totalorder 1, %s10
      %p384 = scmp.lt.s32.totalorder %s10, 67
      %p385 = pnand %p383, %p384
      %p386 = pneg %p385
      // Predicated region
      $region70: #{_fused_matmul.1} parent=5 // pred_check
        _
      $region71: #{_fused_matmul.1} parent=5 // pred_check_branch
        %388 = sbr.rel (%p385) target = $region73
      $region72: #{_fused_matmul.1} parent=5 // pred_region
        %s389 = ssub.s32 %s10, 1
        %s390 = sand.u32 %s44, 1
        %s391 = sand.u32 %s44, 1
        %s392 = smul.addr %s391, 128
        %s393 = scalar_lea.vmem [#allocation3], %s392
        // Predicated region
        $region74: #{_fused_matmul.1} parent=72 // pred_check
          %p394 = pneg %p57
        $region75: #{_fused_matmul.1} parent=72 // pred_check_branch
          %396 = sbr.rel (%p394) target = $region77
        $region76: #{_fused_matmul.1} parent=72 // pred_region
          _
        $region77: #{_fused_matmul.1} parent=72 // pred_fallthru
          _
        %s397 = sand.u32 %s44, 1
        %s398 = sand.u32 %s44, 1
        %s399 = smul.addr %s398, 128
        %s400 = scalar_lea.vmem [#allocation3], %s399
        %p401 = pneg %p57
        %p402 = pneg %p54
        %s403 = smul.u32 16, %s22
        %p404 = scmp.lt.s32.totalorder %s403, 527
        %s405 = scalar_select %p404, %s403, 527
        %p406 = scmp.lt.s32.totalorder %s21, 0
        %s407 = scalar_select %p406, %s21, 0
        %s408 = sadd.s32 %s407, %s405
        %s409 = smul.addr %s408, 4
        %s410 = scalar_lea.vmem %s1, %s409
        %p411 = pneg %p85
        %p412 = pneg %p82
        %p413 = scmp.lt.s32.totalorder %s21, 0
        %s414 = scalar_select %p413, %s21, 0
        %s415 = scalar_lea.vmem %s2, %s414
        %p416 = pneg %p111
        %p417 = pneg %p108
        %p418 = scmp.lt.s32.totalorder %s21, 0
        %s419 = scalar_select %p418, %s21, 0
        %s420 = scalar_lea.vmem %s3, %s419
        %p421 = pneg %p137
        %p422 = pneg %p134
        %p423 = pneg %p165
        %p424 = pneg %p162
        %s425 = smul.u32 32, %s20
        %p426 = scmp.lt.s32.totalorder %s425, 63
        %s427 = scalar_select %p426, %s425, 63
        %p428 = scmp.lt.s32.totalorder %s21, 0
        %s429 = scalar_select %p428, %s21, 0
        %s430 = sadd.s32 %s429, %s427
        %s431 = smul.addr %s430, 8
        %s432 = scalar_lea.vmem %s4, %s431
        %s433 = smul.u32 32, %s20
        %s434 = smul.u32 16, %s22
        %p435 = scmp.lt.s32.totalorder %s434, 527
        %s436 = scalar_select %p435, %s434, 527
        %p437 = scmp.lt.s32.totalorder %s21, 0
        %s438 = scalar_select %p437, %s21, 0
        %s439 = sadd.s32 %s438, %s436
        %s440 = smul.addr %s439, 4
        %s441 = scalar_lea.vmem %s1, %s440
        %s442 = smul.u32 16, %s22
        %p443 = scmp.lt.s32.totalorder %s21, 0
        %s444 = scalar_select %p443, %s21, 0
        %s445 = scalar_lea.vmem %s2, %s444
        %p446 = scmp.lt.s32.totalorder %s21, 0
        %s447 = scalar_select %p446, %s21, 0
        %s448 = scalar_lea.vmem %s3, %s447
        %s449 = smul.u32 32, %s20
        %p450 = scmp.lt.s32.totalorder %s449, 63
        %s451 = scalar_select %p450, %s449, 63
        %p452 = scmp.lt.s32.totalorder %s21, 0
        %s453 = scalar_select %p452, %s21, 0
        %s454 = sadd.s32 %s453, %s451
        %s455 = smul.addr %s454, 8
        %s456 = scalar_lea.vmem %s4, %s455
        %s457 = smul.u32 32, %s20
        %p459 = scmp.eq.s32.totalorder %s22, 0
        // Predicated region
        $region78: #{_fused_matmul.1} parent=72 // pred_check
          %p460 = pneg %p459
        $region79: #{_fused_matmul.1} parent=72 // pred_check_branch
          %462 = sbr.rel (%p460) target = $region81
        $region80: #{_fused_matmul.1} parent=72 // pred_region
          %463 = vst [vmem:[#allocation2] sm:$0xff] 0.0
          %464 = vst [vmem:[#allocation2 + $0x8] sm:$0xff] 0.0
          %465 = vst [vmem:[#allocation2 + $0x10] sm:$0xff] 0.0
          %466 = vst [vmem:[#allocation2 + $0x18] sm:$0xff] 0.0
          %467 = vst [vmem:[#allocation2 + $0x20] sm:$0xff] 0.0
          %468 = vst [vmem:[#allocation2 + $0x28] sm:$0xff] 0.0
          %469 = vst [vmem:[#allocation2 + $0x30] sm:$0xff] 0.0
          %470 = vst [vmem:[#allocation2 + $0x38] sm:$0xff] 0.0
          %471 = vst [vmem:[#allocation2 + $0x40] sm:$0xff] 0.0
          %472 = vst [vmem:[#allocation2 + $0x48] sm:$0xff] 0.0
          %473 = vst [vmem:[#allocation2 + $0x50] sm:$0xff] 0.0
          %474 = vst [vmem:[#allocation2 + $0x58] sm:$0xff] 0.0
          %475 = vst [vmem:[#allocation2 + $0x60] sm:$0xff] 0.0
          %476 = vst [vmem:[#allocation2 + $0x68] sm:$0xff] 0.0
          %477 = vst [vmem:[#allocation2 + $0x70] sm:$0xff] 0.0
          %478 = vst [vmem:[#allocation2 + $0x78] sm:$0xff] 0.0
          %479 = vst [vmem:[#allocation2 + $0x80] sm:$0xff] 0.0
          %480 = vst [vmem:[#allocation2 + $0x88] sm:$0xff] 0.0
          %481 = vst [vmem:[#allocation2 + $0x90] sm:$0xff] 0.0
          %482 = vst [vmem:[#allocation2 + $0x98] sm:$0xff] 0.0
          %483 = vst [vmem:[#allocation2 + $0xa0] sm:$0xff] 0.0
          %484 = vst [vmem:[#allocation2 + $0xa8] sm:$0xff] 0.0
          %485 = vst [vmem:[#allocation2 + $0xb0] sm:$0xff] 0.0
          %486 = vst [vmem:[#allocation2 + $0xb8] sm:$0xff] 0.0
          %487 = vst [vmem:[#allocation2 + $0xc0] sm:$0xff] 0.0
          %488 = vst [vmem:[#allocation2 + $0xc8] sm:$0xff] 0.0
          %489 = vst [vmem:[#allocation2 + $0xd0] sm:$0xff] 0.0
          %490 = vst [vmem:[#allocation2 + $0xd8] sm:$0xff] 0.0
          %491 = vst [vmem:[#allocation2 + $0xe0] sm:$0xff] 0.0
          %492 = vst [vmem:[#allocation2 + $0xe8] sm:$0xff] 0.0
          %493 = vst [vmem:[#allocation2 + $0xf0] sm:$0xff] 0.0
          %494 = vst [vmem:[#allocation2 + $0xf8] sm:$0xff] 0.0
        $region81: #{_fused_matmul.1} parent=72 // pred_fallthru
          _
        %v495 = vld [vmem:[#allocation2] sm:$0xff]
        %v496 = vld [vmem:[#allocation2 + $0x8] sm:$0xff]
        %v497 = vld [vmem:[#allocation2 + $0x10] sm:$0xff]
        %v498 = vld [vmem:[#allocation2 + $0x18] sm:$0xff]
        %v499 = vld [vmem:[#allocation2 + $0x20] sm:$0xff]
        %v500 = vld [vmem:[#allocation2 + $0x28] sm:$0xff]
        %v501 = vld [vmem:[#allocation2 + $0x30] sm:$0xff]
        %v502 = vld [vmem:[#allocation2 + $0x38] sm:$0xff]
        %v503 = vld [vmem:[#allocation2 + $0x40] sm:$0xff]
        %v504 = vld [vmem:[#allocation2 + $0x48] sm:$0xff]
        %v505 = vld [vmem:[#allocation2 + $0x50] sm:$0xff]
        %v506 = vld [vmem:[#allocation2 + $0x58] sm:$0xff]
        %v507 = vld [vmem:[#allocation2 + $0x60] sm:$0xff]
        %v508 = vld [vmem:[#allocation2 + $0x68] sm:$0xff]
        %v509 = vld [vmem:[#allocation2 + $0x70] sm:$0xff]
        %v510 = vld [vmem:[#allocation2 + $0x78] sm:$0xff]
        %v511 = vld [vmem:[#allocation2 + $0x80] sm:$0xff]
        %v512 = vld [vmem:[#allocation2 + $0x88] sm:$0xff]
        %v513 = vld [vmem:[#allocation2 + $0x90] sm:$0xff]
        %v514 = vld [vmem:[#allocation2 + $0x98] sm:$0xff]
        %v515 = vld [vmem:[#allocation2 + $0xa0] sm:$0xff]
        %v516 = vld [vmem:[#allocation2 + $0xa8] sm:$0xff]
        %v517 = vld [vmem:[#allocation2 + $0xb0] sm:$0xff]
        %v518 = vld [vmem:[#allocation2 + $0xb8] sm:$0xff]
        %v519 = vld [vmem:[#allocation2 + $0xc0] sm:$0xff]
        %v520 = vld [vmem:[#allocation2 + $0xc8] sm:$0xff]
        %v521 = vld [vmem:[#allocation2 + $0xd0] sm:$0xff]
        %v522 = vld [vmem:[#allocation2 + $0xd8] sm:$0xff]
        %v523 = vld [vmem:[#allocation2 + $0xe0] sm:$0xff]
        %v524 = vld [vmem:[#allocation2 + $0xe8] sm:$0xff]
        %v525 = vld [vmem:[#allocation2 + $0xf0] sm:$0xff]
        %v526 = vld [vmem:[#allocation2 + $0xf8] sm:$0xff]
        %v527 = vld [vmem:[%s393] sm:$0xf]
        %v528 = vld [vmem:[%s393 + $0x4] sm:$0xf]
        %v529 = vld [vmem:[%s393 + $0x8] sm:$0xf]
        %v530 = vld [vmem:[%s393 + $0xc] sm:$0xf]
        %v531 = vld [vmem:[%s393 + $0x10] sm:$0xf]
        %v532 = vld [vmem:[%s393 + $0x14] sm:$0xf]
        %v533 = vld [vmem:[%s393 + $0x18] sm:$0xf]
        %v534 = vld [vmem:[%s393 + $0x1c] sm:$0xf]
        %v535 = vld [vmem:[%s393 + $0x20] sm:$0xf]
        %v536 = vld [vmem:[%s393 + $0x24] sm:$0xf]
        %v537 = vld [vmem:[%s393 + $0x28] sm:$0xf]
        %v538 = vld [vmem:[%s393 + $0x2c] sm:$0xf]
        %v539 = vld [vmem:[%s393 + $0x30] sm:$0xf]
        %v540 = vld [vmem:[%s393 + $0x34] sm:$0xf]
        %v541 = vld [vmem:[%s393 + $0x38] sm:$0xf]
        %v542 = vld [vmem:[%s393 + $0x3c] sm:$0xf]
        %v543 = vld [vmem:[%s393 + $0x40] sm:$0xf]
        %v544 = vld [vmem:[%s393 + $0x44] sm:$0xf]
        %v545 = vld [vmem:[%s393 + $0x48] sm:$0xf]
        %v546 = vld [vmem:[%s393 + $0x4c] sm:$0xf]
        %v547 = vld [vmem:[%s393 + $0x50] sm:$0xf]
        %v548 = vld [vmem:[%s393 + $0x54] sm:$0xf]
        %v549 = vld [vmem:[%s393 + $0x58] sm:$0xf]
        %v550 = vld [vmem:[%s393 + $0x5c] sm:$0xf]
        %v551 = vld [vmem:[%s393 + $0x60] sm:$0xf]
        %v552 = vld [vmem:[%s393 + $0x64] sm:$0xf]
        %v553 = vld [vmem:[%s393 + $0x68] sm:$0xf]
        %v554 = vld [vmem:[%s393 + $0x6c] sm:$0xf]
        %v555 = vld [vmem:[%s393 + $0x70] sm:$0xf]
        %v556 = vld [vmem:[%s393 + $0x74] sm:$0xf]
        %v557 = vld [vmem:[%s393 + $0x78] sm:$0xf]
        %v558 = vld [vmem:[%s393 + $0x7c] sm:$0xf]
        %v559 = vld [vmem:[%s441] sm:$0xf]
        %v560 = vld [vmem:[%s441 + $0x4] sm:$0xf]
        %v561 = vld [vmem:[%s441 + $0x8] sm:$0xf]
        %v562 = vld [vmem:[%s441 + $0xc] sm:$0xf]
        %v563 = vld [vmem:[%s441 + $0x10] sm:$0xf]
        %v564 = vld [vmem:[%s441 + $0x14] sm:$0xf]
        %v565 = vld [vmem:[%s441 + $0x18] sm:$0xf]
        %v566 = vld [vmem:[%s441 + $0x1c] sm:$0xf]
        %v567 = vld [vmem:[%s441 + $0x20] sm:$0xf]
        %v568 = vld [vmem:[%s441 + $0x24] sm:$0xf]
        %v569 = vld [vmem:[%s441 + $0x28] sm:$0xf]
        %v570 = vld [vmem:[%s441 + $0x2c] sm:$0xf]
        %v571 = vld [vmem:[%s441 + $0x30] sm:$0xf]
        %v572 = vld [vmem:[%s441 + $0x34] sm:$0xf]
        %v573 = vld [vmem:[%s441 + $0x38] sm:$0xf]
        %v574 = vld [vmem:[%s441 + $0x3c] sm:$0xf]
        %v607 = vunpack.c.l.b16 %v527
        %v608 = vunpack.c.l.b16 %v528
        %v609 = vunpack.c.l.b16 %v529
        %v610 = vunpack.c.l.b16 %v530
        %v611 = vunpack.c.l.b16 %v531
        %v612 = vunpack.c.l.b16 %v532
        %v613 = vunpack.c.l.b16 %v533
        %v614 = vunpack.c.l.b16 %v534
        %v615 = vunpack.c.l.b16 %v535
        %v616 = vunpack.c.l.b16 %v536
        %v617 = vunpack.c.l.b16 %v537
        %v618 = vunpack.c.l.b16 %v538
        %v619 = vunpack.c.l.b16 %v539
        %v620 = vunpack.c.l.b16 %v540
        %v621 = vunpack.c.l.b16 %v541
        %v622 = vunpack.c.l.b16 %v542
        %v623 = vunpack.c.l.b16 %v543
        %v624 = vunpack.c.l.b16 %v544
        %v625 = vunpack.c.l.b16 %v545
        %v626 = vunpack.c.l.b16 %v546
        %v627 = vunpack.c.l.b16 %v547
        %v628 = vunpack.c.l.b16 %v548
        %v629 = vunpack.c.l.b16 %v549
        %v630 = vunpack.c.l.b16 %v550
        %v631 = vunpack.c.l.b16 %v551
        %v632 = vunpack.c.l.b16 %v552
        %v633 = vunpack.c.l.b16 %v553
        %v634 = vunpack.c.l.b16 %v554
        %v635 = vunpack.c.l.b16 %v555
        %v636 = vunpack.c.l.b16 %v556
        %v637 = vunpack.c.l.b16 %v557
        %v638 = vunpack.c.l.b16 %v558
        %v639 = vpack.c.b16 %v608, %v607
        %v640 = vpack.c.b16 %v610, %v609
        %v641 = vpack.c.b16 %v612, %v611
        %v642 = vpack.c.b16 %v614, %v613
        %v643 = vpack.c.b16 %v616, %v615
        %v644 = vpack.c.b16 %v618, %v617
        %v645 = vpack.c.b16 %v620, %v619
        %v646 = vpack.c.b16 %v622, %v621
        %v647 = vpack.c.b16 %v624, %v623
        %v648 = vpack.c.b16 %v626, %v625
        %v649 = vpack.c.b16 %v628, %v627
        %v650 = vpack.c.b16 %v630, %v629
        %v651 = vpack.c.b16 %v632, %v631
        %v652 = vpack.c.b16 %v634, %v633
        %v653 = vpack.c.b16 %v636, %v635
        %v654 = vpack.c.b16 %v638, %v637
        %v687 = vunpack.c.l.b16 %v559
        %v688 = vunpack.c.l.b16 %v560
        %v689 = vunpack.c.l.b16 %v561
        %v690 = vunpack.c.l.b16 %v562
        %v691 = vunpack.c.l.b16 %v563
        %v692 = vunpack.c.l.b16 %v564
        %v693 = vunpack.c.l.b16 %v565
        %v694 = vunpack.c.l.b16 %v566
        %v695 = vunpack.c.l.b16 %v567
        %v696 = vunpack.c.l.b16 %v568
        %v697 = vunpack.c.l.b16 %v569
        %v698 = vunpack.c.l.b16 %v570
        %v699 = vunpack.c.l.b16 %v571
        %v700 = vunpack.c.l.b16 %v572
        %v701 = vunpack.c.l.b16 %v573
        %v702 = vunpack.c.l.b16 %v574
        %v703 = vpack.c.b16 %v688, %v687
        %v704 = vpack.c.b16 %v690, %v689
        %v705 = vpack.c.b16 %v692, %v691
        %v706 = vpack.c.b16 %v694, %v693
        %v707 = vpack.c.b16 %v696, %v695
        %v708 = vpack.c.b16 %v698, %v697
        %v709 = vpack.c.b16 %v700, %v699
        %v710 = vpack.c.b16 %v702, %v701
        %719 = vmatprep.subr.bf16.mxu0 0
        %720 = vmatpush1.bf16.msra.mxu0 %v703
        %721 = vmatprep.subr.bf16.mxu0 0
        %722 = vmatpush1.bf16.msra.mxu0 %v704
        %723 = vmatprep.subr.bf16.mxu0 0
        %724 = vmatpush1.bf16.msra.mxu0 %v705
        %725 = vmatprep.subr.bf16.mxu0 0
        %726 = vmatpush1.bf16.msra.mxu0 %v706
        %727 = vmatprep.subr.bf16.mxu0 0
        %728 = vmatpush1.bf16.msra.mxu0 %v707
        %729 = vmatprep.subr.bf16.mxu0 0
        %730 = vmatpush1.bf16.msra.mxu0 %v708
        %731 = vmatprep.subr.bf16.mxu0 0
        %732 = vmatpush1.bf16.msra.mxu0 %v709
        %733 = vmatprep.subr.bf16.mxu0 0
        %734 = vmatpush1.bf16.msra.mxu0 %v710
        %735 = vmatprep.subr.bf16.mxu0 0
        %736 = vmatpush1.bf16.msra.mxu0 0
        %737 = vmatprep.subr.bf16.mxu0 0
        %738 = vmatpush1.bf16.msra.mxu0 0
        %739 = vmatprep.subr.bf16.mxu0 0
        %740 = vmatpush1.bf16.msra.mxu0 0
        %741 = vmatprep.subr.bf16.mxu0 0
        %742 = vmatpush1.bf16.msra.mxu0 0
        %743 = vmatprep.subr.bf16.mxu0 0
        %744 = vmatpush1.bf16.msra.mxu0 0
        %745 = vmatprep.subr.bf16.mxu0 0
        %746 = vmatpush1.bf16.msra.mxu0 0
        %747 = vmatprep.subr.bf16.mxu0 0
        %748 = vmatpush1.bf16.msra.mxu0 0
        %749 = vmatprep.subr.bf16.mxu0 0
        %750 = vmatpush1.bf16.msra.mxu0 0
        %751 = vmatprep.mubr.bf16.mxu0 0
        %752 = vmatmul.mubr.bf16.gmra.mrb[0].mxu0 %v639
        %v753 = vpop.f32.mrb[0].mxu0
        %v754 = vadd.f32 0.0, %v753
        %v755 = vpop.f32.mrb[0].mxu0
        %v756 = vpop.f32.mrb[0].mxu0
        %v757 = vadd.f32 0.0, %v756
        %v758 = vpop.f32.mrb[0].mxu0
        %759 = vmatprep.mubr.bf16.mxu0 0
        %760 = vmatmul.mubr.bf16.gmra.mrb[0].mxu0 %v640
        %v761 = vpop.f32.mrb[0].mxu0
        %v762 = vadd.f32 0.0, %v761
        %v763 = vpop.f32.mrb[0].mxu0
        %v764 = vpop.f32.mrb[0].mxu0
        %v765 = vadd.f32 0.0, %v764
        %v766 = vpop.f32.mrb[0].mxu0
        %767 = vmatprep.mubr.bf16.mxu0 0
        %768 = vmatmul.mubr.bf16.gmra.mrb[0].mxu0 %v641
        %v769 = vpop.f32.mrb[0].mxu0
        %v770 = vadd.f32 0.0, %v769
        %v771 = vpop.f32.mrb[0].mxu0
        %v772 = vpop.f32.mrb[0].mxu0
        %v773 = vadd.f32 0.0, %v772
        %v774 = vpop.f32.mrb[0].mxu0
        %775 = vmatprep.mubr.bf16.mxu0 0
        %776 = vmatmul.mubr.bf16.gmra.mrb[0].mxu0 %v642
        %v777 = vpop.f32.mrb[0].mxu0
        %v778 = vadd.f32 0.0, %v777
        %v779 = vpop.f32.mrb[0].mxu0
        %v780 = vpop.f32.mrb[0].mxu0
        %v781 = vadd.f32 0.0, %v780
        %v782 = vpop.f32.mrb[0].mxu0
        %783 = vmatprep.mubr.bf16.mxu0 0
        %784 = vmatmul.mubr.bf16.gmra.mrb[0].mxu0 %v643
        %v785 = vpop.f32.mrb[0].mxu0
        %v786 = vadd.f32 0.0, %v785
        %v787 = vpop.f32.mrb[0].mxu0
        %v788 = vpop.f32.mrb[0].mxu0
        %v789 = vadd.f32 0.0, %v788
        %v790 = vpop.f32.mrb[0].mxu0
        %791 = vmatprep.mubr.bf16.mxu0 0
        %792 = vmatmul.mubr.bf16.gmra.mrb[0].mxu0 %v644
        %v793 = vpop.f32.mrb[0].mxu0
        %v794 = vadd.f32 0.0, %v793
        %v795 = vpop.f32.mrb[0].mxu0
        %v796 = vpop.f32.mrb[0].mxu0
        %v797 = vadd.f32 0.0, %v796
        %v798 = vpop.f32.mrb[0].mxu0
        %799 = vmatprep.mubr.bf16.mxu0 0
        %800 = vmatmul.mubr.bf16.gmra.mrb[0].mxu0 %v645
        %v801 = vpop.f32.mrb[0].mxu0
        %v802 = vadd.f32 0.0, %v801
        %v803 = vpop.f32.mrb[0].mxu0
        %v804 = vpop.f32.mrb[0].mxu0
        %v805 = vadd.f32 0.0, %v804
        %v806 = vpop.f32.mrb[0].mxu0
        %807 = vmatprep.mubr.bf16.mxu0 0
        %808 = vmatmul.mubr.bf16.gmra.mrb[0].mxu0 %v646
        %v809 = vpop.f32.mrb[0].mxu0
        %v810 = vadd.f32 0.0, %v809
        %v811 = vpop.f32.mrb[0].mxu0
        %v812 = vpop.f32.mrb[0].mxu0
        %v813 = vadd.f32 0.0, %v812
        %v814 = vpop.f32.mrb[0].mxu0
        %815 = vmatprep.mubr.bf16.mxu0 0
        %816 = vmatmul.mubr.bf16.gmra.mrb[0].mxu0 %v647
        %v817 = vpop.f32.mrb[0].mxu0
        %v818 = vadd.f32 0.0, %v817
        %v819 = vpop.f32.mrb[0].mxu0
        %v820 = vpop.f32.mrb[0].mxu0
        %v821 = vadd.f32 0.0, %v820
        %v822 = vpop.f32.mrb[0].mxu0
        %823 = vmatprep.mubr.bf16.mxu0 0
        %824 = vmatmul.mubr.bf16.gmra.mrb[0].mxu0 %v648
        %v825 = vpop.f32.mrb[0].mxu0
        %v826 = vadd.f32 0.0, %v825
        %v827 = vpop.f32.mrb[0].mxu0
        %v828 = vpop.f32.mrb[0].mxu0
        %v829 = vadd.f32 0.0, %v828
        %v830 = vpop.f32.mrb[0].mxu0
        %831 = vmatprep.mubr.bf16.mxu0 0
        %832 = vmatmul.mubr.bf16.gmra.mrb[0].mxu0 %v649
        %v833 = vpop.f32.mrb[0].mxu0
        %v834 = vadd.f32 0.0, %v833
        %v835 = vpop.f32.mrb[0].mxu0
        %v836 = vpop.f32.mrb[0].mxu0
        %v837 = vadd.f32 0.0, %v836
        %v838 = vpop.f32.mrb[0].mxu0
        %839 = vmatprep.mubr.bf16.mxu0 0
        %840 = vmatmul.mubr.bf16.gmra.mrb[0].mxu0 %v650
        %v841 = vpop.f32.mrb[0].mxu0
        %v842 = vadd.f32 0.0, %v841
        %v843 = vpop.f32.mrb[0].mxu0
        %v844 = vpop.f32.mrb[0].mxu0
        %v845 = vadd.f32 0.0, %v844
        %v846 = vpop.f32.mrb[0].mxu0
        %847 = vmatprep.mubr.bf16.mxu0 0
        %848 = vmatmul.mubr.bf16.gmra.mrb[0].mxu0 %v651
        %v849 = vpop.f32.mrb[0].mxu0
        %v850 = vadd.f32 0.0, %v849
        %v851 = vpop.f32.mrb[0].mxu0
        %v852 = vpop.f32.mrb[0].mxu0
        %v853 = vadd.f32 0.0, %v852
        %v854 = vpop.f32.mrb[0].mxu0
        %855 = vmatprep.mubr.bf16.mxu0 0
        %856 = vmatmul.mubr.bf16.gmra.mrb[0].mxu0 %v652
        %v857 = vpop.f32.mrb[0].mxu0
        %v858 = vadd.f32 0.0, %v857
        %v859 = vpop.f32.mrb[0].mxu0
        %v860 = vpop.f32.mrb[0].mxu0
        %v861 = vadd.f32 0.0, %v860
        %v862 = vpop.f32.mrb[0].mxu0
        %863 = vmatprep.mubr.bf16.mxu0 0
        %864 = vmatmul.mubr.bf16.gmra.mrb[0].mxu0 %v653
        %v865 = vpop.f32.mrb[0].mxu0
        %v866 = vadd.f32 0.0, %v865
        %v867 = vpop.f32.mrb[0].mxu0
        %v868 = vpop.f32.mrb[0].mxu0
        %v869 = vadd.f32 0.0, %v868
        %v870 = vpop.f32.mrb[0].mxu0
        %871 = vmatprep.mubr.bf16.mxu0 0
        %872 = vmatmul.mubr.bf16.gmra.mrb[0].mxu0 %v654
        %v873 = vpop.f32.mrb[0].mxu0
        %v874 = vadd.f32 0.0, %v873
        %v875 = vpop.f32.mrb[0].mxu0
        %v876 = vpop.f32.mrb[0].mxu0
        %v877 = vadd.f32 0.0, %v876
        %v878 = vpop.f32.mrb[0].mxu0
        %879 = vdwg.mxu0
        %v880 = vadd.f32 %v495, %v754
        %v881 = vadd.f32 %v496, %v757
        %v882 = vadd.f32 %v497, %v762
        %v883 = vadd.f32 %v498, %v765
        %v884 = vadd.f32 %v499, %v770
        %v885 = vadd.f32 %v500, %v773
        %v886 = vadd.f32 %v501, %v778
        %v887 = vadd.f32 %v502, %v781
        %v888 = vadd.f32 %v503, %v786
        %v889 = vadd.f32 %v504, %v789
        %v890 = vadd.f32 %v505, %v794
        %v891 = vadd.f32 %v506, %v797
        %v892 = vadd.f32 %v507, %v802
        %v893 = vadd.f32 %v508, %v805
        %v894 = vadd.f32 %v509, %v810
        %v895 = vadd.f32 %v510, %v813
        %v896 = vadd.f32 %v511, %v818
        %v897 = vadd.f32 %v512, %v821
        %v898 = vadd.f32 %v513, %v826
        %v899 = vadd.f32 %v514, %v829
        %v900 = vadd.f32 %v515, %v834
        %v901 = vadd.f32 %v516, %v837
        %v902 = vadd.f32 %v517, %v842
        %v903 = vadd.f32 %v518, %v845
        %v904 = vadd.f32 %v519, %v850
        %v905 = vadd.f32 %v520, %v853
        %v906 = vadd.f32 %v521, %v858
        %v907 = vadd.f32 %v522, %v861
        %v908 = vadd.f32 %v523, %v866
        %v909 = vadd.f32 %v524, %v869
        %v910 = vadd.f32 %v525, %v874
        %v911 = vadd.f32 %v526, %v877
        %912 = vst [vmem:[#allocation2] sm:$0xff] %v880
        %913 = vst [vmem:[#allocation2 + $0x8] sm:$0xff] %v881
        %914 = vst [vmem:[#allocation2 + $0x10] sm:$0xff] %v882
        %915 = vst [vmem:[#allocation2 + $0x18] sm:$0xff] %v883
        %916 = vst [vmem:[#allocation2 + $0x20] sm:$0xff] %v884
        %917 = vst [vmem:[#allocation2 + $0x28] sm:$0xff] %v885
        %918 = vst [vmem:[#allocation2 + $0x30] sm:$0xff] %v886
        %919 = vst [vmem:[#allocation2 + $0x38] sm:$0xff] %v887
        %920 = vst [vmem:[#allocation2 + $0x40] sm:$0xff] %v888
        %921 = vst [vmem:[#allocation2 + $0x48] sm:$0xff] %v889
        %922 = vst [vmem:[#allocation2 + $0x50] sm:$0xff] %v890
        %923 = vst [vmem:[#allocation2 + $0x58] sm:$0xff] %v891
        %924 = vst [vmem:[#allocation2 + $0x60] sm:$0xff] %v892
        %925 = vst [vmem:[#allocation2 + $0x68] sm:$0xff] %v893
        %926 = vst [vmem:[#allocation2 + $0x70] sm:$0xff] %v894
        %927 = vst [vmem:[#allocation2 + $0x78] sm:$0xff] %v895
        %928 = vst [vmem:[#allocation2 + $0x80] sm:$0xff] %v896
        %929 = vst [vmem:[#allocation2 + $0x88] sm:$0xff] %v897
        %930 = vst [vmem:[#allocation2 + $0x90] sm:$0xff] %v898
        %931 = vst [vmem:[#allocation2 + $0x98] sm:$0xff] %v899
        %932 = vst [vmem:[#allocation2 + $0xa0] sm:$0xff] %v900
        %933 = vst [vmem:[#allocation2 + $0xa8] sm:$0xff] %v901
        %934 = vst [vmem:[#allocation2 + $0xb0] sm:$0xff] %v902
        %935 = vst [vmem:[#allocation2 + $0xb8] sm:$0xff] %v903
        %936 = vst [vmem:[#allocation2 + $0xc0] sm:$0xff] %v904
        %937 = vst [vmem:[#allocation2 + $0xc8] sm:$0xff] %v905
        %938 = vst [vmem:[#allocation2 + $0xd0] sm:$0xff] %v906
        %939 = vst [vmem:[#allocation2 + $0xd8] sm:$0xff] %v907
        %940 = vst [vmem:[#allocation2 + $0xe0] sm:$0xff] %v908
        %941 = vst [vmem:[#allocation2 + $0xe8] sm:$0xff] %v909
        %942 = vst [vmem:[#allocation2 + $0xf0] sm:$0xff] %v910
        %943 = vst [vmem:[#allocation2 + $0xf8] sm:$0xff] %v911
        %p944 = scmp.eq.s32.totalorder %s22, 32
        // Predicated region
        $region82: #{_fused_matmul.1} parent=72 // pred_check
          %p945 = pneg %p944
        $region83: #{_fused_matmul.1} parent=72 // pred_check_branch
          %947 = sbr.rel (%p945) target = $region85
        $region84: #{_fused_matmul.1} parent=72 // pred_region
          %v948 = vld [vmem:[#allocation2] sm:$0xff]
          %v949 = vld [vmem:[#allocation2 + $0x8] sm:$0xff]
          %v950 = vld [vmem:[#allocation2 + $0x10] sm:$0xff]
          %v951 = vld [vmem:[#allocation2 + $0x18] sm:$0xff]
          %v952 = vld [vmem:[#allocation2 + $0x20] sm:$0xff]
          %v953 = vld [vmem:[#allocation2 + $0x28] sm:$0xff]
          %v954 = vld [vmem:[#allocation2 + $0x30] sm:$0xff]
          %v955 = vld [vmem:[#allocation2 + $0x38] sm:$0xff]
          %v956 = vld [vmem:[#allocation2 + $0x40] sm:$0xff]
          %v957 = vld [vmem:[#allocation2 + $0x48] sm:$0xff]
          %v958 = vld [vmem:[#allocation2 + $0x50] sm:$0xff]
          %v959 = vld [vmem:[#allocation2 + $0x58] sm:$0xff]
          %v960 = vld [vmem:[#allocation2 + $0x60] sm:$0xff]
          %v961 = vld [vmem:[#allocation2 + $0x68] sm:$0xff]
          %v962 = vld [vmem:[#allocation2 + $0x70] sm:$0xff]
          %v963 = vld [vmem:[#allocation2 + $0x78] sm:$0xff]
          %v964 = vld [vmem:[#allocation2 + $0x80] sm:$0xff]
          %v965 = vld [vmem:[#allocation2 + $0x88] sm:$0xff]
          %v966 = vld [vmem:[#allocation2 + $0x90] sm:$0xff]
          %v967 = vld [vmem:[#allocation2 + $0x98] sm:$0xff]
          %v968 = vld [vmem:[#allocation2 + $0xa0] sm:$0xff]
          %v969 = vld [vmem:[#allocation2 + $0xa8] sm:$0xff]
          %v970 = vld [vmem:[#allocation2 + $0xb0] sm:$0xff]
          %v971 = vld [vmem:[#allocation2 + $0xb8] sm:$0xff]
          %v972 = vld [vmem:[#allocation2 + $0xc0] sm:$0xff]
          %v973 = vld [vmem:[#allocation2 + $0xc8] sm:$0xff]
          %v974 = vld [vmem:[#allocation2 + $0xd0] sm:$0xff]
          %v975 = vld [vmem:[#allocation2 + $0xd8] sm:$0xff]
          %v976 = vld [vmem:[#allocation2 + $0xe0] sm:$0xff]
          %v977 = vld [vmem:[#allocation2 + $0xe8] sm:$0xff]
          %v978 = vld [vmem:[#allocation2 + $0xf0] sm:$0xff]
          %v979 = vld [vmem:[#allocation2 + $0xf8] sm:$0xff]
          %v980 = vld [vmem:[%s445] sm:$0x1]
          %v982 = vlaneseq
          %v983 = vshrl.u32 %v982, 7
          %v984 = vsub.s32 0, %v983
          %v985 = vrot.slane %v980, %v984
          %v987 = vmul.f32 %v948, %v985
          %v988 = vmul.f32 %v949, %v985
          %v989 = vmul.f32 %v950, %v985
          %v990 = vmul.f32 %v951, %v985
          %v991 = vmul.f32 %v952, %v985
          %v992 = vmul.f32 %v953, %v985
          %v993 = vmul.f32 %v954, %v985
          %v994 = vmul.f32 %v955, %v985
          %v995 = vmul.f32 %v956, %v985
          %v996 = vmul.f32 %v957, %v985
          %v997 = vmul.f32 %v958, %v985
          %v998 = vmul.f32 %v959, %v985
          %v999 = vmul.f32 %v960, %v985
          %v1000 = vmul.f32 %v961, %v985
          %v1001 = vmul.f32 %v962, %v985
          %v1002 = vmul.f32 %v963, %v985
          %v1003 = vmul.f32 %v964, %v985
          %v1004 = vmul.f32 %v965, %v985
          %v1005 = vmul.f32 %v966, %v985
          %v1006 = vmul.f32 %v967, %v985
          %v1007 = vmul.f32 %v968, %v985
          %v1008 = vmul.f32 %v969, %v985
          %v1009 = vmul.f32 %v970, %v985
          %v1010 = vmul.f32 %v971, %v985
          %v1011 = vmul.f32 %v972, %v985
          %v1012 = vmul.f32 %v973, %v985
          %v1013 = vmul.f32 %v974, %v985
          %v1014 = vmul.f32 %v975, %v985
          %v1015 = vmul.f32 %v976, %v985
          %v1016 = vmul.f32 %v977, %v985
          %v1017 = vmul.f32 %v978, %v985
          %v1018 = vmul.f32 %v979, %v985
          %v1019 = vld [vmem:[%s448] sm:$0x1]
          %v1021 = vlaneseq
          %v1022 = vshrl.u32 %v1021, 7
          %v1023 = vsub.s32 0, %v1022
          %v1024 = vrot.slane %v1019, %v1023
          %v1026 = vadd.f32 %v987, %v1024
          %v1027 = vadd.f32 %v988, %v1024
          %v1028 = vadd.f32 %v989, %v1024
          %v1029 = vadd.f32 %v990, %v1024
          %v1030 = vadd.f32 %v991, %v1024
          %v1031 = vadd.f32 %v992, %v1024
          %v1032 = vadd.f32 %v993, %v1024
          %v1033 = vadd.f32 %v994, %v1024
          %v1034 = vadd.f32 %v995, %v1024
          %v1035 = vadd.f32 %v996, %v1024
          %v1036 = vadd.f32 %v997, %v1024
          %v1037 = vadd.f32 %v998, %v1024
          %v1038 = vadd.f32 %v999, %v1024
          %v1039 = vadd.f32 %v1000, %v1024
          %v1040 = vadd.f32 %v1001, %v1024
          %v1041 = vadd.f32 %v1002, %v1024
          %v1042 = vadd.f32 %v1003, %v1024
          %v1043 = vadd.f32 %v1004, %v1024
          %v1044 = vadd.f32 %v1005, %v1024
          %v1045 = vadd.f32 %v1006, %v1024
          %v1046 = vadd.f32 %v1007, %v1024
          %v1047 = vadd.f32 %v1008, %v1024
          %v1048 = vadd.f32 %v1009, %v1024
          %v1049 = vadd.f32 %v1010, %v1024
          %v1050 = vadd.f32 %v1011, %v1024
          %v1051 = vadd.f32 %v1012, %v1024
          %v1052 = vadd.f32 %v1013, %v1024
          %v1053 = vadd.f32 %v1014, %v1024
          %v1054 = vadd.f32 %v1015, %v1024
          %v1055 = vadd.f32 %v1016, %v1024
          %v1056 = vadd.f32 %v1017, %v1024
          %v1057 = vadd.f32 %v1018, %v1024
          %v1058 = vmax.f32 %v1026, 0.0
          %v1059 = vmax.f32 %v1027, 0.0
          %v1060 = vmax.f32 %v1028, 0.0
          %v1061 = vmax.f32 %v1029, 0.0
          %v1062 = vmax.f32 %v1030, 0.0
          %v1063 = vmax.f32 %v1031, 0.0
          %v1064 = vmax.f32 %v1032, 0.0
          %v1065 = vmax.f32 %v1033, 0.0
          %v1066 = vmax.f32 %v1034, 0.0
          %v1067 = vmax.f32 %v1035, 0.0
          %v1068 = vmax.f32 %v1036, 0.0
          %v1069 = vmax.f32 %v1037, 0.0
          %v1070 = vmax.f32 %v1038, 0.0
          %v1071 = vmax.f32 %v1039, 0.0
          %v1072 = vmax.f32 %v1040, 0.0
          %v1073 = vmax.f32 %v1041, 0.0
          %v1074 = vmax.f32 %v1042, 0.0
          %v1075 = vmax.f32 %v1043, 0.0
          %v1076 = vmax.f32 %v1044, 0.0
          %v1077 = vmax.f32 %v1045, 0.0
          %v1078 = vmax.f32 %v1046, 0.0
          %v1079 = vmax.f32 %v1047, 0.0
          %v1080 = vmax.f32 %v1048, 0.0
          %v1081 = vmax.f32 %v1049, 0.0
          %v1082 = vmax.f32 %v1050, 0.0
          %v1083 = vmax.f32 %v1051, 0.0
          %v1084 = vmax.f32 %v1052, 0.0
          %v1085 = vmax.f32 %v1053, 0.0
          %v1086 = vmax.f32 %v1054, 0.0
          %v1087 = vmax.f32 %v1055, 0.0
          %v1088 = vmax.f32 %v1056, 0.0
          %v1089 = vmax.f32 %v1057, 0.0
          %1090 = vst [vmem:[%s456] sm:$0xff] %v1058
          %1091 = vst [vmem:[%s456 + $0x8] sm:$0xff] %v1059
          %1092 = vst [vmem:[%s456 + $0x10] sm:$0xff] %v1060
          %1093 = vst [vmem:[%s456 + $0x18] sm:$0xff] %v1061
          %1094 = vst [vmem:[%s456 + $0x20] sm:$0xff] %v1062
          %1095 = vst [vmem:[%s456 + $0x28] sm:$0xff] %v1063
          %1096 = vst [vmem:[%s456 + $0x30] sm:$0xff] %v1064
          %1097 = vst [vmem:[%s456 + $0x38] sm:$0xff] %v1065
          %1098 = vst [vmem:[%s456 + $0x40] sm:$0xff] %v1066
          %1099 = vst [vmem:[%s456 + $0x48] sm:$0xff] %v1067
          %1100 = vst [vmem:[%s456 + $0x50] sm:$0xff] %v1068
          %1101 = vst [vmem:[%s456 + $0x58] sm:$0xff] %v1069
          %1102 = vst [vmem:[%s456 + $0x60] sm:$0xff] %v1070
          %1103 = vst [vmem:[%s456 + $0x68] sm:$0xff] %v1071
          %1104 = vst [vmem:[%s456 + $0x70] sm:$0xff] %v1072
          %1105 = vst [vmem:[%s456 + $0x78] sm:$0xff] %v1073
          %1106 = vst [vmem:[%s456 + $0x80] sm:$0xff] %v1074
          %1107 = vst [vmem:[%s456 + $0x88] sm:$0xff] %v1075
          %1108 = vst [vmem:[%s456 + $0x90] sm:$0xff] %v1076
          %1109 = vst [vmem:[%s456 + $0x98] sm:$0xff] %v1077
          %1110 = vst [vmem:[%s456 + $0xa0] sm:$0xff] %v1078
          %1111 = vst [vmem:[%s456 + $0xa8] sm:$0xff] %v1079
          %1112 = vst [vmem:[%s456 + $0xb0] sm:$0xff] %v1080
          %1113 = vst [vmem:[%s456 + $0xb8] sm:$0xff] %v1081
          %1114 = vst [vmem:[%s456 + $0xc0] sm:$0xff] %v1082
          %1115 = vst [vmem:[%s456 + $0xc8] sm:$0xff] %v1083
          %1116 = vst [vmem:[%s456 + $0xd0] sm:$0xff] %v1084
          %1117 = vst [vmem:[%s456 + $0xd8] sm:$0xff] %v1085
          %1118 = vst [vmem:[%s456 + $0xe0] sm:$0xff] %v1086
          %1119 = vst [vmem:[%s456 + $0xe8] sm:$0xff] %v1087
          %1120 = vst [vmem:[%s456 + $0xf0] sm:$0xff] %v1088
          %1121 = vst [vmem:[%s456 + $0xf8] sm:$0xff] %v1089
        $region85: #{_fused_matmul.1} parent=72 // pred_fallthru
          _
        %s1122 = smul.u32 32, %s20
        %p1123 = scmp.lt.s32.totalorder %s1122, 63
        %s1124 = scalar_select %p1123, %s1122, 63
        %p1125 = scmp.lt.s32.totalorder %s21, 0
        %s1126 = scalar_select %p1125, %s21, 0
        %s1127 = sadd.s32 %s1126, %s1124
        %s1128 = smul.addr %s1127, 8
        %s1129 = scalar_lea.vmem %s4, %s1128
        // Predicated region
        $region86: #{_fused_matmul.1} parent=72 // pred_check
          %p1130 = pneg %p162
        $region87: #{_fused_matmul.1} parent=72 // pred_check_branch
          %1132 = sbr.rel (%p1130) target = $region89
        $region88: #{_fused_matmul.1} parent=72 // pred_region
          %s1133 = smul.u32 32, %s20
        $region89: #{_fused_matmul.1} parent=72 // pred_fallthru
          _
      $region73: #{_fused_matmul.1} parent=5 // pred_fallthru
        _
      %p1134 = scmp.le.s32.totalorder 2, %s10
      // Predicated region
      $region90: #{_fused_matmul.1} parent=5 // pred_check
        %p1135 = pneg %p1134
      $region91: #{_fused_matmul.1} parent=5 // pred_check_branch
        %1137 = sbr.rel (%p1135) target = $region93
      $region92: #{_fused_matmul.1} parent=5 // pred_region
        %s1138 = ssub.s32 %s10, 2
        // Predicated region
        $region94: #{_fused_matmul.1} parent=92 // pred_check
          %p1139 = pneg %p168
        $region95: #{_fused_matmul.1} parent=92 // pred_check_branch
          %1141 = sbr.rel (%p1139) target = $region97
        $region96: #{_fused_matmul.1} parent=92 // pred_region
          %s1142 = smul.u32 32, %s23
          %p1143 = scmp.lt.s32.totalorder %s1142, 63
          %s1144 = scalar_select %p1143, %s1142, 63
          %p1145 = scmp.lt.s32.totalorder %s24, 0
          %s1146 = scalar_select %p1145, %s24, 0
          %s1147 = sadd.s32 %s1146, %s1144
          %s1148 = smul.addr %s1147, 8
          %s1149 = scalar_lea.vmem %s4, %s1148
        $region97: #{_fused_matmul.1} parent=92 // pred_fallthru
          _
      $region93: #{_fused_matmul.1} parent=5 // pred_fallthru
        _
    $region6: #{_fused_matmul.1} parent=1 // loop_footer
      %s14 = sadd.s32 1, %s10
    $region7: #{_fused_matmul.1} parent=1 // loop_footer_branch
      %9 = sbr.rel target = $region3
    $region8: #{_fused_matmul.1} parent=1 // loop_exit
      _

</llo_original>
